<compile_context>
chip_gen: v7x
topology: tpu7x:2x2x1
jax: 0.10.0
libtpu: 0.0.40
codegen_flags: <defaults>
</compile_context>

<pallas_src>
import jax
import jax.numpy as jnp
from jax import lax
from jax.experimental import pallas as pl
from jax.experimental.pallas import tpu as pltpu

block_size = 256
n_embd = 384
head_size = 32


def _head_kernel(x_ref, w_ref, o_ref, qkv_ref):
    """One grid step = B_blk batch elements.

    x_ref:   (B_blk*T, C)    f32  -- flattened (batch, seq) rows of x
    w_ref:   (C, 3*H)        bf16 -- fused [q|k|v] weights (scale folded into q)
    o_ref:   (B_blk, T, H)        -- attention output
    qkv_ref: (B_blk, T, 3*H) f32  -- VMEM scratch used to "un-flatten" the projection
    """
    b_blk, seq, h = o_ref.shape

    # ---- fused QKV projection: single 2-D matmul, bf16 MXU inputs, f32 accumulate.
    xm = x_ref[...].astype(jnp.bfloat16)                          # (B_blk*T, C)
    qkv2 = jnp.dot(xm, w_ref[...],
                   preferred_element_type=jnp.float32)            # (B_blk*T, 3H)

    # ---- un-flatten the batch dim via tile-aligned scratch stores (avoids an
    #      in-kernel reshape / 3D x 2D dot_general).  Unrolled; b_blk <= 8.
    for b in range(b_blk):
        qkv_ref[b] = qkv2[b * seq:(b + 1) * seq, :]

    qkv = qkv_ref[...]                                            # (B_blk, T, 3H) f32
    q = qkv[..., 0 * h:1 * h].astype(jnp.bfloat16)                # scale already folded
    k = qkv[..., 1 * h:2 * h].astype(jnp.bfloat16)
    v = qkv[..., 2 * h:3 * h].astype(jnp.bfloat16)

    # ---- scores: batched contraction over the head dim (no explicit k.T transpose).
    s = jnp.einsum('bqh,bkh->bqk', q, k,
                   preferred_element_type=jnp.float32)            # (B_blk, T, T)

    # ---- causal mask: one (T, T) additive bias per grid step, broadcast over batch.
    row = lax.broadcasted_iota(jnp.int32, (seq, seq), 0)
    col = lax.broadcasted_iota(jnp.int32, (seq, seq), 1)
    bias = jnp.where(col <= row, 0.0, -jnp.inf).astype(jnp.float32)
    s = s + bias[None, :, :]

    # ---- numerically stable softmax; normalize after PV ((T,H) elems, not (T,T)).
    m = jnp.max(s, axis=-1, keepdims=True)
    p = jnp.exp(s - m)                                            # entries in [0, 1]
    denom = jnp.sum(p, axis=-1, keepdims=True)                    # (B_blk, T, 1)

    out = jnp.einsum('bqk,bkh->bqh', p.astype(jnp.bfloat16), v,
                     preferred_element_type=jnp.float32)          # (B_blk, T, H)
    out = out * pl.reciprocal(denom, approx=True)
    o_ref[...] = out.astype(o_ref.dtype)


def _pick_b_blk(B, max_blk=8):
    """Largest divisor of B that is <= max_blk while keeping >= 2 grid steps
    (so the parallel batch axis can still be split across TensorCores)."""
    best = 1
    for d in range(1, min(max_blk, B) + 1):
        if B % d == 0 and B // d >= 2:
            best = d
    return best


def head_forward(x, w_key, w_query, w_value, *, max_b_blk=8):
    """x: (B, T, C); w_*: PyTorch nn.Linear weights of shape (head_size, n_embd)."""
    B, T, C = x.shape
    H = w_key.shape[0]
    assert C == n_embd and T <= block_size
    assert T % 8 == 0, "sequence length must be a multiple of 8 (sublane tiling)"

    # Fused [q | k | v] projection weight; PyTorch Linear computes x @ W.T so we
    # pre-transpose, and fold the 1/sqrt(H) score scale into the q slice.
    scale = jnp.float32(H) ** -0.5
    wq = jnp.asarray(w_query).T * scale          # (C, H)
    wk = jnp.asarray(w_key).T                    # (C, H)
    wv = jnp.asarray(w_value).T                  # (C, H)
    wqkv = jnp.concatenate([wq, wk, wv], axis=1).astype(jnp.bfloat16)   # (C, 3H)

    b_blk = _pick_b_blk(B, max_b_blk)
    grid = (B // b_blk,)

    # Flatten (B, T) so the in-kernel projection is a single 2-D matmul.
    x2 = x.reshape(B * T, C)

    return pl.pallas_call(
        _head_kernel,
        out_shape=jax.ShapeDtypeStruct((B, T, H), x.dtype),
        grid_spec=pltpu.PrefetchScalarGridSpec(
            num_scalar_prefetch=0,
            grid=grid,
            in_specs=[
                pl.BlockSpec((b_blk * T, C), lambda i: (i, 0)),
                pl.BlockSpec((C, 3 * H), lambda i: (0, 0)),
            ],
            out_specs=pl.BlockSpec((b_blk, T, H), lambda i: (i, 0, 0)),
            scratch_shapes=[pltpu.VMEM((b_blk, T, 3 * H), jnp.float32)],
        ),
        compiler_params=pltpu.CompilerParams(
            dimension_semantics=("parallel",)),
    )(x2, wqkv)


def head_reference(x, w_key, w_query, w_value):
    """Pure-JAX reference mirroring the PyTorch forward (eval mode)."""
    H = w_key.shape[0]
    k = x @ w_key.T
    q = x @ w_query.T
    v = x @ w_value.T
    wei = (q @ jnp.swapaxes(k, -2, -1)) * (H ** -0.5)
    T = x.shape[1]
    tril = jnp.tril(jnp.ones((T, T), dtype=bool))
    wei = jnp.where(tril, wei, -jnp.inf)
    wei = jax.nn.softmax(wei, axis=-1)
    return wei @ v


if __name__ == "__main__":
    key = jax.random.PRNGKey(0)
    kx, kk, kq, kv = jax.random.split(key, 4)

    B, T = 2, 8
    x = jax.random.normal(kx, (B, T, n_embd), dtype=jnp.float32)

    # Deterministic parameter init (nn.Linear(n_embd, head_size, bias=False)
    # weight shape: (head_size, n_embd)).
    bound = 1.0 / (n_embd ** 0.5)
    w_key = jax.random.uniform(kk, (head_size, n_embd), jnp.float32, -bound, bound)
    w_query = jax.random.uniform(kq, (head_size, n_embd), jnp.float32, -bound, bound)
    w_value = jax.random.uniform(kv, (head_size, n_embd), jnp.float32, -bound, bound)

    out = head_forward(x, w_key, w_query, w_value)
    out = jax.block_until_ready(out)

    ref = head_reference(x, w_key, w_query, w_value)
    assert out.shape == (B, T, head_size)
    max_err = jnp.max(jnp.abs(out - ref))
    # bf16 MXU inputs + approx reciprocal -> tolerance loosened vs pure-f32 check.
    assert jnp.allclose(out, ref, atol=5e-2, rtol=5e-2), f"mismatch vs reference (max abs err={max_err})"

    print("KERNEL_OK")
</pallas_src>

<mosaic_0001>
module attributes {stable_mosaic.version = 11 : i64} {
  func.func @_head_kernel(%arg0: i32, %arg1: memref<8x384xf32, #tpu.memory_space<vmem>>, %arg2: memref<384x96xbf16, #tpu.memory_space<vmem>>, %arg3: memref<1x8x32xf32, #tpu.memory_space<vmem>>, %arg4: memref<1x8x96xf32, #tpu.memory_space<vmem>>) attributes {dimension_semantics = [#tpu.dimension_semantics<parallel>], iteration_bounds = array<i64: 2>, scalar_prefetch = 0 : i64, scratch_operands = 1 : i64, tpu.core_type = #tpu.core_type<tc>, window_params = [{transform_indices = @transform_0, window_bounds = array<i64: 8, 384>}, {pipeline_mode = #tpu.pipeline_mode<synchronous>, transform_indices = @transform_1, window_bounds = array<i64: 384, 96>}, {transform_indices = @transform_2, window_bounds = array<i64: 1, 8, 32>}]} {
    %c0 = arith.constant 0 : index
    %c0_0 = arith.constant 0 : index
    %0 = vector.load %arg1[%c0, %c0_0] : memref<8x384xf32, #tpu.memory_space<vmem>>, vector<8x384xf32>
    %1 = arith.truncf %0 : vector<8x384xf32> to vector<8x384xbf16>
    %c0_1 = arith.constant 0 : index
    %c0_2 = arith.constant 0 : index
    %2 = vector.load %arg2[%c0_1, %c0_2] : memref<384x96xbf16, #tpu.memory_space<vmem>>, vector<384x96xbf16>
    %cst = arith.constant dense<0.000000e+00> : vector<8x96xf32>
    %3 = tpu.matmul %1, %2, %cst {dimension_numbers = #tpu.dot_dimension_numbers<[1], [0], [0], [1], [0, 0, 1, 1], [], []>} : vector<8x384xbf16>, vector<384x96xbf16>, vector<8x96xf32> -> vector<8x96xf32>
    %c0_3 = arith.constant 0 : index
    %c0_4 = arith.constant 0 : index
    %c0_5 = arith.constant 0 : index
    %4 = vector.load %arg4[%c0_3, %c0_4, %c0_5] : memref<1x8x96xf32, #tpu.memory_space<vmem>>, vector<1x8x96xf32>
    %5 = vector.shape_cast %4 : vector<1x8x96xf32> to vector<8x96xf32>
    %6 = vector.shape_cast %3 : vector<8x96xf32> to vector<1x8x96xf32>
    tpu.vector_store %arg4[%c0_3, %c0_4, %c0_5], %6 {strides = array<i32>} : memref<1x8x96xf32, #tpu.memory_space<vmem>>, vector<1x8x96xf32>,
    %c0_6 = arith.constant 0 : index
    %c0_7 = arith.constant 0 : index
    %c0_8 = arith.constant 0 : index
    %7 = vector.load %arg4[%c0_6, %c0_7, %c0_8] : memref<1x8x96xf32, #tpu.memory_space<vmem>>, vector<1x8x96xf32>
    %8 = vector.extract_strided_slice %7 {offsets = [0, 0, 0], sizes = [1, 8, 32], strides = [1, 1, 1]} : vector<1x8x96xf32> to vector<1x8x32xf32>
    %9 = arith.truncf %8 : vector<1x8x32xf32> to vector<1x8x32xbf16>
    %10 = vector.extract_strided_slice %7 {offsets = [0, 0, 32], sizes = [1, 8, 32], strides = [1, 1, 1]} : vector<1x8x96xf32> to vector<1x8x32xf32>
    %11 = arith.truncf %10 : vector<1x8x32xf32> to vector<1x8x32xbf16>
    %12 = vector.extract_strided_slice %7 {offsets = [0, 0, 64], sizes = [1, 8, 32], strides = [1, 1, 1]} : vector<1x8x96xf32> to vector<1x8x32xf32>
    %13 = arith.truncf %12 : vector<1x8x32xf32> to vector<1x8x32xbf16>
    "tpu.trace_start"() <{level = 10 : i32, message = "bqh,bkh->bqk"}> : () -> ()
    %cst_9 = arith.constant dense<0.000000e+00> : vector<1x8x8xf32>
    %14 = tpu.matmul %9, %11, %cst_9 {dimension_numbers = #tpu.dot_dimension_numbers<[2], [2], [1], [1], [0, 0, 0, 1, 1, 1], [0], [0]>} : vector<1x8x32xbf16>, vector<1x8x32xbf16>, vector<1x8x8xf32> -> vector<1x8x8xf32>
    "tpu.trace_stop"() : () -> ()
    %15 = tpu.iota {dimensions = array<i32: 0>} : vector<8x8xi32>
    %16 = tpu.iota {dimensions = array<i32: 1>} : vector<8x8xi32>
    %17 = arith.cmpi sle, %16, %15 : vector<8x8xi32>
    %cst_10 = arith.constant 0.000000e+00 : f32
    %cst_11 = arith.constant 0xFF800000 : f32
    %18 = vector.broadcast %cst_10 : f32 to vector<8x8xf32>
    %19 = vector.broadcast %cst_11 : f32 to vector<8x8xf32>
    %20 = arith.select %17, %18, %19 : vector<8x8xi1>, vector<8x8xf32>
    %21 = vector.shape_cast %20 : vector<8x8xf32> to vector<1x8x8xf32>
    %22 = arith.addf %14, %21 : vector<1x8x8xf32>
    %cst_12 = arith.constant dense<0xFF800000> : vector<1x8xf32>
    %23 = vector.multi_reduction <maximumf>, %22, %cst_12 [2] : vector<1x8x8xf32> to vector<1x8xf32>
    %24 = vector.shape_cast %23 : vector<1x8xf32> to vector<1x8x1xf32>
    %25 = vector.broadcast %24 : vector<1x8x1xf32> to vector<1x8x8xf32>
    %26 = arith.subf %22, %25 : vector<1x8x8xf32>
    %27 = math.exp %26 : vector<1x8x8xf32>
    %cst_13 = arith.constant dense<0.000000e+00> : vector<1x8xf32>
    %28 = vector.multi_reduction <add>, %27, %cst_13 [2] : vector<1x8x8xf32> to vector<1x8xf32>
    %29 = vector.shape_cast %28 : vector<1x8xf32> to vector<1x8x1xf32>
    %30 = arith.truncf %27 : vector<1x8x8xf32> to vector<1x8x8xbf16>
    "tpu.trace_start"() <{level = 10 : i32, message = "bqk,bkh->bqh"}> : () -> ()
    %cst_14 = arith.constant dense<0.000000e+00> : vector<1x8x32xf32>
    %31 = tpu.matmul %30, %13, %cst_14 {dimension_numbers = #tpu.dot_dimension_numbers<[2], [1], [1], [2], [0, 0, 0, 1, 1, 2], [0], [0]>} : vector<1x8x8xbf16>, vector<1x8x32xbf16>, vector<1x8x32xf32> -> vector<1x8x32xf32>
    "tpu.trace_stop"() : () -> ()
    %32 = tpu.reciprocal %29 {approx = true} : vector<1x8x1xf32> -> vector<1x8x1xf32>
    %33 = vector.broadcast %32 : vector<1x8x1xf32> to vector<1x8x32xf32>
    %34 = arith.mulf %31, %33 : vector<1x8x32xf32>
    %c0_15 = arith.constant 0 : index
    %c0_16 = arith.constant 0 : index
    %c0_17 = arith.constant 0 : index
    %35 = vector.load %arg3[%c0_15, %c0_16, %c0_17] : memref<1x8x32xf32, #tpu.memory_space<vmem>>, vector<1x8x32xf32>
    tpu.vector_store %arg3[%c0_15, %c0_16, %c0_17], %34 {strides = array<i32>} : memref<1x8x32xf32, #tpu.memory_space<vmem>>, vector<1x8x32xf32>,
    return
  }
  func.func @transform_0(%arg0: i32) -> (i32, i32) {
    %c0_i32 = arith.constant 0 : i32
    %c0_i32_0 = arith.constant 0 : i32
    return %arg0, %c0_i32 : i32, i32
  }
  func.func @transform_1(%arg0: i32) -> (i32, i32) {
    %c0_i32 = arith.constant 0 : i32
    %c0_i32_0 = arith.constant 0 : i32
    %c0_i32_1 = arith.constant 0 : i32
    return %c0_i32, %c0_i32_0 : i32, i32
  }
  func.func @transform_2(%arg0: i32) -> (i32, i32, i32) {
    %c0_i32 = arith.constant 0 : i32
    %c0_i32_0 = arith.constant 0 : i32
    %c0_i32_1 = arith.constant 0 : i32
    return %arg0, %c0_i32, %c0_i32_0 : i32, i32, i32
  }
}

</mosaic_0001>

<llo_original>
// kernel: tpu_custom_call.1
$region0: #{tpu_custom_call.1}
  #allocation0 [shape = 'u32[]', space=smem, size = 0x4, offset = 0x4, fixed_abs, tag = 'smem constant byte address 0x4 - core index']
  #allocation1 [shape = 'u32[144,128]{1,0:T(1,128)}', space=vmem, size = 0x12000, scoped, tag = 'internal scratch']
  #allocation2 [shape = 'f32[1,8,96]{2,1,0:T(8,128)}', space=vmem, size = 0x1000, scoped, tag = 'scratch operand']
  %s0 = inlined_call_operand.vmem [shape: f32[16,384], index: 0, kind: input, shape index: {}]
  %s1 = inlined_call_operand.vmem [shape: bf16[384,96], index: 1, kind: input, shape index: {}]
  %s2 = inlined_call_operand.hbm [shape: f32[2,8,32], index: 2, kind: output, shape index: {}]
  %s3 = sld [smem:[#allocation0]]
  $region41: #{tpu_custom_call.1} parent=0
    _
  %s5 = ssub.s32 1, %s3
  %s6 = scalar_select 0, %s5, %s3
  $region1: #{tpu_custom_call.1} parent=0
    #allocation3 [shape = 'u8[8192]{0}', space=vmem, size = 0x2000, scoped, tag = 'output window, operand 0']
    #allocation4 [shape = 's32[2]{0}', space=sflag, size = 0x8, scoped, tag = 'scoped memory for tpu_custom_call.1']
    %7 = vsyncpa [#allocation4], 0
    %s8 = scalar_lea.sflag [#allocation4], 1
    %9 = vsyncpa %s8, 0
    loop: start=0, step=1, limit=4
    $region2: #{tpu_custom_call.1} parent=1 // loop_pre_header
      _
    $region3: #{tpu_custom_call.1} parent=1 // loop_header
      %s11 = sphi 0, %s15
      %p12 = scmp.ge.s32.totalorder %s11, 4
      %s21 = sphi 0, %s23
      %s24 = sphi 0, %s21
      %s25 = sphi 0, %s24
      %s41 = sphi 0, %s25
      %s45 = sphi 0, %s45
      %s47 = sphi 0, %s45
      %s48 = sphi 0, %s47
      %s62 = sphi 0, %s48
      %s68 = sphi 0, %s70
      %s71 = sphi 0, %s68
      %s72 = sphi 0, %s71
      %s88 = sphi 0, %s72
    $region4: #{tpu_custom_call.1} parent=1 // loop_header_branch
      %14 = sbr.rel (%p12) target = $region8
    $region5: #{tpu_custom_call.1} parent=1 // loop_body
      %s16 = ssub.s32 %s11, 1
      %s17 = ssub.s32 %s11, 2
      %s18 = sadd.s32 %s11, 1
      %s19 = ssub.s32 %s11, %s18
      %p20 = scmp.eq.s32.totalorder %s19, 0
      %s22 = sadd.s32 %s21, 1
      %s23 = scalar_select %p20, %s21, %s22
      %p26 = pneg %p20
      %p27 = scmp.eq.s32.totalorder %s11, 1
      %p28 = por %p26, %p27
      %p29 = scmp.ne.s32.totalorder %s21, %s24
      %p30 = scmp.eq.s32.totalorder %s11, 0
      %p31 = por %p29, %p30
      %p32 = scmp.ne.s32.totalorder %s21, %s24
      %p33 = scmp.eq.s32.totalorder %s16, 1
      %p34 = por %p32, %p33
      %p35 = scmp.ne.s32.totalorder %s24, %s25
      %p36 = scmp.eq.s32.totalorder %s16, 0
      %p37 = por %p35, %p36
      %p38 = scmp.ne.s32.totalorder %s24, %s25
      %p39 = scmp.eq.s32.totalorder %s17, 1
      %p40 = por %p38, %p39
      %p42 = scmp.ne.s32.totalorder %s25, %s41
      %p43 = scmp.eq.s32.totalorder %s17, 0
      %p44 = por %p42, %p43
      %s46 = sadd.s32 %s45, 1
      %p49 = scmp.eq.s32.totalorder %s11, 1
      %p50 = scmp.ne.s32.totalorder %s45, %s47
      %p51 = scmp.eq.s32.totalorder %s11, 0
      %p52 = por %p50, %p51
      %p53 = scmp.ne.s32.totalorder %s45, %s47
      %p54 = scmp.eq.s32.totalorder %s16, 1
      %p55 = por %p53, %p54
      %p56 = scmp.ne.s32.totalorder %s47, %s48
      %p57 = scmp.eq.s32.totalorder %s16, 0
      %p58 = por %p56, %p57
      %p59 = scmp.ne.s32.totalorder %s47, %s48
      %p60 = scmp.eq.s32.totalorder %s17, 1
      %p61 = por %p59, %p60
      %p63 = scmp.ne.s32.totalorder %s48, %s62
      %p64 = scmp.eq.s32.totalorder %s17, 0
      %p65 = por %p63, %p64
      %s66 = ssub.s32 %s11, %s18
      %p67 = scmp.eq.s32.totalorder %s66, 0
      %s69 = sadd.s32 %s68, 1
      %s70 = scalar_select %p67, %s68, %s69
      %p73 = pneg %p67
      %p74 = scmp.eq.s32.totalorder %s11, 1
      %p75 = por %p73, %p74
      %p76 = scmp.ne.s32.totalorder %s68, %s71
      %p77 = scmp.eq.s32.totalorder %s11, 0
      %p78 = por %p76, %p77
      %p79 = scmp.ne.s32.totalorder %s68, %s71
      %p80 = scmp.eq.s32.totalorder %s16, 1
      %p81 = por %p79, %p80
      %p82 = scmp.ne.s32.totalorder %s71, %s72
      %p83 = scmp.eq.s32.totalorder %s16, 0
      %p84 = por %p82, %p83
      %p85 = scmp.ne.s32.totalorder %s71, %s72
      %p86 = scmp.eq.s32.totalorder %s17, 1
      %p87 = por %p85, %p86
      %p89 = scmp.ne.s32.totalorder %s72, %s88
      %p90 = scmp.eq.s32.totalorder %s17, 0
      %p91 = por %p89, %p90
      %p92 = scmp.le.s32.totalorder 1, %s11
      %p93 = scmp.lt.s32.totalorder %s11, 3
      %p94 = pnand %p92, %p93
      %p95 = pneg %p94
      // Predicated region
      $region9: #{tpu_custom_call.1} parent=5 // pred_check
        _
      $region10: #{tpu_custom_call.1} parent=5 // pred_check_branch
        %97 = sbr.rel (%p94) target = $region12
      $region11: #{tpu_custom_call.1} parent=5 // pred_region
        %s98 = ssub.s32 %s11, 1
        // Predicated region
        $region13: #{tpu_custom_call.1} parent=11 // pred_check
          %p99 = pneg %p58
        $region14: #{tpu_custom_call.1} parent=11 // pred_check_branch
          %101 = sbr.rel (%p99) target = $region16
        $region15: #{tpu_custom_call.1} parent=11 // pred_region
          _
        $region16: #{tpu_custom_call.1} parent=11 // pred_fallthru
          _
      $region12: #{tpu_custom_call.1} parent=5 // pred_fallthru
        _
      %p102 = scmp.lt.s32.totalorder %s11, 2
      // Predicated region
      $region17: #{tpu_custom_call.1} parent=5 // pred_check
        %p103 = pneg %p102
      $region18: #{tpu_custom_call.1} parent=5 // pred_check_branch
        %105 = sbr.rel (%p103) target = $region20
      $region19: #{tpu_custom_call.1} parent=5 // pred_region
        // Predicated region
        $region21: #{tpu_custom_call.1} parent=19 // pred_check
          %p106 = pneg %p31
        $region22: #{tpu_custom_call.1} parent=19 // pred_check_branch
          %108 = sbr.rel (%p106) target = $region24
        $region23: #{tpu_custom_call.1} parent=19 // pred_region
          %p109 = scmp.lt.s32.totalorder %s11, 1
          %s110 = scalar_select %p109, %s11, 1
          %s111 = smul.addr %s110, 3
          %s112 = smul.addr %s111, 8
          %s113 = scalar_lea.vmem %s0, %s112
        $region24: #{tpu_custom_call.1} parent=19 // pred_fallthru
          _
      $region20: #{tpu_custom_call.1} parent=5 // pred_fallthru
        _
      %p114 = scmp.le.s32.totalorder 1, %s11
      %p115 = scmp.lt.s32.totalorder %s11, 3
      %p116 = pnand %p114, %p115
      %p117 = pneg %p116
      // Predicated region
      $region25: #{tpu_custom_call.1} parent=5 // pred_check
        _
      $region26: #{tpu_custom_call.1} parent=5 // pred_check_branch
        %119 = sbr.rel (%p116) target = $region28
      $region27: #{tpu_custom_call.1} parent=5 // pred_region
        %s120 = ssub.s32 %s11, 1
        %p121 = scmp.lt.s32.totalorder %s16, 1
        %s122 = scalar_select %p121, %s16, 1
        %s123 = smul.addr %s122, 3
        %s124 = smul.addr %s123, 8
        %s125 = scalar_lea.vmem %s0, %s124
        %p126 = pneg %p37
        %p127 = pneg %p34
        %p128 = pneg %p58
        %p129 = pneg %p55
        %p130 = pneg %p84
        %p131 = pneg %p81
        %s132 = sand.u32 %s71, 1
        %s133 = scalar_lea.sflag [#allocation4], %s132
        %s134 = sand.u32 %s71, 1
        %s135 = smul.addr %s134, 8
        %s136 = scalar_lea.vmem [#allocation3], %s135
        %p137 = scmp.lt.s32.totalorder %s16, 1
        %s138 = scalar_select %p137, %s16, 1
        %s139 = smul.addr %s138, 3
        %s140 = smul.addr %s139, 8
        %s141 = scalar_lea.vmem %s0, %s140
        %v143 = vld [vmem:[%s141] sm:$0xff]
        %v144 = vld [vmem:[%s141 + $0x8] sm:$0xff]
        %v145 = vld [vmem:[%s141 + $0x10] sm:$0xff]
        %v146 = vpack.c.bf16 %v143, %v143
        %v147 = vpack.c.bf16 %v144, %v144
        %v148 = vpack.c.bf16 %v145, %v145
        %v149 = vld [vmem:[%s1] sm:$0xf]
        %v150 = vld [vmem:[%s1 + $0x4] sm:$0xf]
        %v151 = vld [vmem:[%s1 + $0x8] sm:$0xf]
        %v152 = vld [vmem:[%s1 + $0xc] sm:$0xf]
        %v153 = vld [vmem:[%s1 + $0x10] sm:$0xf]
        %v154 = vld [vmem:[%s1 + $0x14] sm:$0xf]
        %v155 = vld [vmem:[%s1 + $0x18] sm:$0xf]
        %v156 = vld [vmem:[%s1 + $0x1c] sm:$0xf]
        %v157 = vld [vmem:[%s1 + $0x20] sm:$0xf]
        %v158 = vld [vmem:[%s1 + $0x24] sm:$0xf]
        %v159 = vld [vmem:[%s1 + $0x28] sm:$0xf]
        %v160 = vld [vmem:[%s1 + $0x2c] sm:$0xf]
        %v161 = vld [vmem:[%s1 + $0x30] sm:$0xf]
        %v162 = vld [vmem:[%s1 + $0x34] sm:$0xf]
        %v163 = vld [vmem:[%s1 + $0x38] sm:$0xf]
        %v164 = vld [vmem:[%s1 + $0x3c] sm:$0xf]
        %v165 = vld [vmem:[%s1 + $0x40] sm:$0xf]
        %v166 = vld [vmem:[%s1 + $0x44] sm:$0xf]
        %v167 = vld [vmem:[%s1 + $0x48] sm:$0xf]
        %v168 = vld [vmem:[%s1 + $0x4c] sm:$0xf]
        %v169 = vld [vmem:[%s1 + $0x50] sm:$0xf]
        %v170 = vld [vmem:[%s1 + $0x54] sm:$0xf]
        %v171 = vld [vmem:[%s1 + $0x58] sm:$0xf]
        %v172 = vld [vmem:[%s1 + $0x5c] sm:$0xf]
        %v173 = vld [vmem:[%s1 + $0x60] sm:$0xf]
        %v174 = vld [vmem:[%s1 + $0x64] sm:$0xf]
        %v175 = vld [vmem:[%s1 + $0x68] sm:$0xf]
        %v176 = vld [vmem:[%s1 + $0x6c] sm:$0xf]
        %v177 = vld [vmem:[%s1 + $0x70] sm:$0xf]
        %v178 = vld [vmem:[%s1 + $0x74] sm:$0xf]
        %v179 = vld [vmem:[%s1 + $0x78] sm:$0xf]
        %v180 = vld [vmem:[%s1 + $0x7c] sm:$0xf]
        %v181 = vld [vmem:[%s1 + $0x80] sm:$0xf]
        %v182 = vld [vmem:[%s1 + $0x84] sm:$0xf]
        %v183 = vld [vmem:[%s1 + $0x88] sm:$0xf]
        %v184 = vld [vmem:[%s1 + $0x8c] sm:$0xf]
        %v185 = vld [vmem:[%s1 + $0x90] sm:$0xf]
        %v186 = vld [vmem:[%s1 + $0x94] sm:$0xf]
        %v187 = vld [vmem:[%s1 + $0x98] sm:$0xf]
        %v188 = vld [vmem:[%s1 + $0x9c] sm:$0xf]
        %v189 = vld [vmem:[%s1 + $0xa0] sm:$0xf]
        %v190 = vld [vmem:[%s1 + $0xa4] sm:$0xf]
        %v191 = vld [vmem:[%s1 + $0xa8] sm:$0xf]
        %v192 = vld [vmem:[%s1 + $0xac] sm:$0xf]
        %v193 = vld [vmem:[%s1 + $0xb0] sm:$0xf]
        %v194 = vld [vmem:[%s1 + $0xb4] sm:$0xf]
        %v195 = vld [vmem:[%s1 + $0xb8] sm:$0xf]
        %v196 = vld [vmem:[%s1 + $0xbc] sm:$0xf]
        %v245 = vunpack.c.l.b16 %v149
        %v246 = vunpack.c.l.b16 %v150
        %v247 = vunpack.c.l.b16 %v151
        %v248 = vunpack.c.l.b16 %v152
        %v249 = vunpack.c.l.b16 %v153
        %v250 = vunpack.c.l.b16 %v154
        %v251 = vunpack.c.l.b16 %v155
        %v252 = vunpack.c.l.b16 %v156
        %v253 = vunpack.c.l.b16 %v157
        %v254 = vunpack.c.l.b16 %v158
        %v255 = vunpack.c.l.b16 %v159
        %v256 = vunpack.c.l.b16 %v160
        %v257 = vunpack.c.l.b16 %v161
        %v258 = vunpack.c.l.b16 %v162
        %v259 = vunpack.c.l.b16 %v163
        %v260 = vunpack.c.l.b16 %v164
        %v261 = vunpack.c.l.b16 %v165
        %v262 = vunpack.c.l.b16 %v166
        %v263 = vunpack.c.l.b16 %v167
        %v264 = vunpack.c.l.b16 %v168
        %v265 = vunpack.c.l.b16 %v169
        %v266 = vunpack.c.l.b16 %v170
        %v267 = vunpack.c.l.b16 %v171
        %v268 = vunpack.c.l.b16 %v172
        %v269 = vunpack.c.l.b16 %v173
        %v270 = vunpack.c.l.b16 %v174
        %v271 = vunpack.c.l.b16 %v175
        %v272 = vunpack.c.l.b16 %v176
        %v273 = vunpack.c.l.b16 %v177
        %v274 = vunpack.c.l.b16 %v178
        %v275 = vunpack.c.l.b16 %v179
        %v276 = vunpack.c.l.b16 %v180
        %v277 = vunpack.c.l.b16 %v181
        %v278 = vunpack.c.l.b16 %v182
        %v279 = vunpack.c.l.b16 %v183
        %v280 = vunpack.c.l.b16 %v184
        %v281 = vunpack.c.l.b16 %v185
        %v282 = vunpack.c.l.b16 %v186
        %v283 = vunpack.c.l.b16 %v187
        %v284 = vunpack.c.l.b16 %v188
        %v285 = vunpack.c.l.b16 %v189
        %v286 = vunpack.c.l.b16 %v190
        %v287 = vunpack.c.l.b16 %v191
        %v288 = vunpack.c.l.b16 %v192
        %v289 = vunpack.c.l.b16 %v193
        %v290 = vunpack.c.l.b16 %v194
        %v291 = vunpack.c.l.b16 %v195
        %v292 = vunpack.c.l.b16 %v196
        %v293 = vpack.c.b16 %v246, %v245
        %v294 = vpack.c.b16 %v248, %v247
        %v295 = vpack.c.b16 %v250, %v249
        %v296 = vpack.c.b16 %v252, %v251
        %v297 = vpack.c.b16 %v254, %v253
        %v298 = vpack.c.b16 %v256, %v255
        %v299 = vpack.c.b16 %v258, %v257
        %v300 = vpack.c.b16 %v260, %v259
        %v301 = vpack.c.b16 %v262, %v261
        %v302 = vpack.c.b16 %v264, %v263
        %v303 = vpack.c.b16 %v266, %v265
        %v304 = vpack.c.b16 %v268, %v267
        %v305 = vpack.c.b16 %v270, %v269
        %v306 = vpack.c.b16 %v272, %v271
        %v307 = vpack.c.b16 %v274, %v273
        %v308 = vpack.c.b16 %v276, %v275
        %v309 = vpack.c.b16 %v278, %v277
        %v310 = vpack.c.b16 %v280, %v279
        %v311 = vpack.c.b16 %v282, %v281
        %v312 = vpack.c.b16 %v284, %v283
        %v313 = vpack.c.b16 %v286, %v285
        %v314 = vpack.c.b16 %v288, %v287
        %v315 = vpack.c.b16 %v290, %v289
        %v316 = vpack.c.b16 %v292, %v291
        %341 = vmatprep.subr.bf16.mxu0 0
        %342 = vmatpush1.bf16.msra.mxu0 %v293
        %343 = vmatprep.subr.bf16.mxu0 0
        %344 = vmatpush1.bf16.msra.mxu0 %v294
        %345 = vmatprep.subr.bf16.mxu0 0
        %346 = vmatpush1.bf16.msra.mxu0 %v295
        %347 = vmatprep.subr.bf16.mxu0 0
        %348 = vmatpush1.bf16.msra.mxu0 %v296
        %349 = vmatprep.subr.bf16.mxu0 0
        %350 = vmatpush1.bf16.msra.mxu0 %v297
        %351 = vmatprep.subr.bf16.mxu0 0
        %352 = vmatpush1.bf16.msra.mxu0 %v298
        %353 = vmatprep.subr.bf16.mxu0 0
        %354 = vmatpush1.bf16.msra.mxu0 %v299
        %355 = vmatprep.subr.bf16.mxu0 0
        %356 = vmatpush1.bf16.msra.mxu0 %v300
        %357 = vmatprep.subr.bf16.mxu0 0
        %358 = vmatpush1.bf16.msra.mxu0 %v301
        %359 = vmatprep.subr.bf16.mxu0 0
        %360 = vmatpush1.bf16.msra.mxu0 %v302
        %361 = vmatprep.subr.bf16.mxu0 0
        %362 = vmatpush1.bf16.msra.mxu0 %v303
        %363 = vmatprep.subr.bf16.mxu0 0
        %364 = vmatpush1.bf16.msra.mxu0 %v304
        %365 = vmatprep.subr.bf16.mxu0 0
        %366 = vmatpush1.bf16.msra.mxu0 %v305
        %367 = vmatprep.subr.bf16.mxu0 0
        %368 = vmatpush1.bf16.msra.mxu0 %v306
        %369 = vmatprep.subr.bf16.mxu0 0
        %370 = vmatpush1.bf16.msra.mxu0 %v307
        %371 = vmatprep.subr.bf16.mxu0 0
        %372 = vmatpush1.bf16.msra.mxu0 %v308
        %373 = vmatprep.mubr.bf16.mxu0 %v147
        %374 = vmatmul.mubr.bf16.gmra.mrb[0].mxu0 %v146
        %v375 = vpop.f32.mrb[0].mxu0
        %v376 = vadd.f32 0.0, %v375
        %v377 = vpop.f32.mrb[0].mxu0
        %v378 = vpop.f32.mrb[0].mxu0
        %v379 = vpop.f32.mrb[0].mxu0
        %380 = vdwg.mxu0
        %381 = vmatprep.subr.bf16.mxu0 0
        %382 = vmatpush1.bf16.msra.mxu0 %v309
        %383 = vmatprep.subr.bf16.mxu0 0
        %384 = vmatpush1.bf16.msra.mxu0 %v310
        %385 = vmatprep.subr.bf16.mxu0 0
        %386 = vmatpush1.bf16.msra.mxu0 %v311
        %387 = vmatprep.subr.bf16.mxu0 0
        %388 = vmatpush1.bf16.msra.mxu0 %v312
        %389 = vmatprep.subr.bf16.mxu0 0
        %390 = vmatpush1.bf16.msra.mxu0 %v313
        %391 = vmatprep.subr.bf16.mxu0 0
        %392 = vmatpush1.bf16.msra.mxu0 %v314
        %393 = vmatprep.subr.bf16.mxu0 0
        %394 = vmatpush1.bf16.msra.mxu0 %v315
        %395 = vmatprep.subr.bf16.mxu0 0
        %396 = vmatpush1.bf16.msra.mxu0 %v316
        %397 = vmatprep.subr.bf16.mxu0 0
        %398 = vmatpush1.bf16.msra.mxu0 0
        %399 = vmatprep.subr.bf16.mxu0 0
        %400 = vmatpush1.bf16.msra.mxu0 0
        %401 = vmatprep.subr.bf16.mxu0 0
        %402 = vmatpush1.bf16.msra.mxu0 0
        %403 = vmatprep.subr.bf16.mxu0 0
        %404 = vmatpush1.bf16.msra.mxu0 0
        %405 = vmatprep.subr.bf16.mxu0 0
        %406 = vmatpush1.bf16.msra.mxu0 0
        %407 = vmatprep.subr.bf16.mxu0 0
        %408 = vmatpush1.bf16.msra.mxu0 0
        %409 = vmatprep.subr.bf16.mxu0 0
        %410 = vmatpush1.bf16.msra.mxu0 0
        %411 = vmatprep.subr.bf16.mxu0 0
        %412 = vmatpush1.bf16.msra.mxu0 0
        %413 = vmatprep.mubr.bf16.mxu0 0
        %414 = vmatmul.mubr.bf16.gmra.mrb[0].mxu0 %v148
        %v415 = vpop.f32.mrb[0].mxu0
        %v416 = vadd.f32 %v376, %v415
        %v417 = vpop.f32.mrb[0].mxu0
        %v418 = vpop.f32.mrb[0].mxu0
        %v419 = vpop.f32.mrb[0].mxu0
        %420 = vdwg.mxu0
        %vm421 = vcmask 785408
        %422 = vst.msk [vmem:[#allocation2] sm:$0xff] %vm421, %v416
        %v423 = vld [vmem:[#allocation2] sm:$0xff]
        %v424 = vpack.c.bf16 %v423, %v423
        %v425 = vlaneseq
        %v426 = vshrl.u32 %v425, 7
        %v427 = vlaneseq
        %v428 = vand.u32 %v427, 127
        %vm429 = vcmp.le.s32.totalorder %v428, %v426
        %v430 = vsel %vm429, 0.0, -inf
        %432 = vrot.lane.b32.xlu0 %v424, 96
        %v433 = vpop.permute.xlu0 %432
        %vm434 = vcmask 261120
        %v436 = vsel %vm434, %v424, 0
        %v439 = vsel %vm434, %v433, 0
        %441 = vmatprep.subr.bf16.mxu0 0
        %442 = vmatpush1.bf16.xpose.msra.mxu0 %v439
        %443 = vmatprep.subr.bf16.mxu0 0
        %444 = vmatpush1.bf16.xpose.msra.mxu0 0
        %445 = vmatprep.subr.bf16.mxu0 0
        %446 = vmatpush1.bf16.xpose.msra.mxu0 0
        %447 = vmatprep.subr.bf16.mxu0 0
        %448 = vmatpush1.bf16.xpose.msra.mxu0 0
        %449 = vmatprep.subr.bf16.mxu0 0
        %450 = vmatpush1.bf16.xpose.msra.mxu0 0
        %451 = vmatprep.subr.bf16.mxu0 0
        %452 = vmatpush1.bf16.xpose.msra.mxu0 0
        %453 = vmatprep.subr.bf16.mxu0 0
        %454 = vmatpush1.bf16.xpose.msra.mxu0 0
        %455 = vmatprep.subr.bf16.mxu0 0
        %456 = vmatpush1.bf16.xpose.msra.mxu0 0
        %457 = vmatprep.subr.bf16.mxu0 0
        %458 = vmatpush1.bf16.xpose.msra.mxu0 0
        %459 = vmatprep.subr.bf16.mxu0 0
        %460 = vmatpush1.bf16.xpose.msra.mxu0 0
        %461 = vmatprep.subr.bf16.mxu0 0
        %462 = vmatpush1.bf16.xpose.msra.mxu0 0
        %463 = vmatprep.subr.bf16.mxu0 0
        %464 = vmatpush1.bf16.xpose.msra.mxu0 0
        %465 = vmatprep.subr.bf16.mxu0 0
        %466 = vmatpush1.bf16.xpose.msra.mxu0 0
        %467 = vmatprep.subr.bf16.mxu0 0
        %468 = vmatpush1.bf16.xpose.msra.mxu0 0
        %469 = vmatprep.subr.bf16.mxu0 0
        %470 = vmatpush1.bf16.xpose.msra.mxu0 0
        %471 = vmatprep.subr.bf16.mxu0 0
        %472 = vmatpush1.bf16.xpose.msra.mxu0 0
        %473 = vmatprep.mubr.bf16.mxu0 0
        %474 = vmatmul.mubr.bf16.gmra.mrb[0].mxu0 %v436
        %v475 = vpop.f32.mrb[0].mxu0
        %v476 = vadd.f32 %v430, %v475
        %v477 = vpop.f32.mrb[0].mxu0
        %v478 = vpop.f32.mrb[0].mxu0
        %v479 = vpop.f32.mrb[0].mxu0
        %480 = vdwg.mxu0
        %vm481 = vcmask 64512
        %v482 = vsel %vm481, %v476, -inf
        %483 = vmax.xlane.f32.xlu0 %v482
        %v484 = vpop.xlane.xlu0 %483
        %v485 = vsub.f32 %v476, %v484
        %v486 = vmul.f32 %v485, 1.442695
        %v487 = vpow.pop %v486
        %v488 = vsel %vm481, %v487, 0.0
        %489 = vadd.xlane.f32.xlu0 %v488
        %v490 = vpop.xlane.xlu0 %489
        %v491 = vpack.c.bf16 %v487, %v487
        %492 = vrot.lane.b32.xlu0 %v424, 64
        %v493 = vpop.permute.xlu0 %492
        %v495 = vsel %vm481, %v491, 0
        %vm497 = vcmask 1043456
        %v499 = vsel %vm497, %v493, 0
        %501 = vmatprep.subr.bf16.mxu0 0
        %502 = vmatpush1.bf16.msra.mxu0 %v499
        %503 = vmatprep.subr.bf16.mxu0 0
        %504 = vmatpush1.bf16.msra.mxu0 0
        %505 = vmatprep.subr.bf16.mxu0 0
        %506 = vmatpush1.bf16.msra.mxu0 0
        %507 = vmatprep.subr.bf16.mxu0 0
        %508 = vmatpush1.bf16.msra.mxu0 0
        %509 = vmatprep.subr.bf16.mxu0 0
        %510 = vmatpush1.bf16.msra.mxu0 0
        %511 = vmatprep.subr.bf16.mxu0 0
        %512 = vmatpush1.bf16.msra.mxu0 0
        %513 = vmatprep.subr.bf16.mxu0 0
        %514 = vmatpush1.bf16.msra.mxu0 0
        %515 = vmatprep.subr.bf16.mxu0 0
        %516 = vmatpush1.bf16.msra.mxu0 0
        %517 = vmatprep.subr.bf16.mxu0 0
        %518 = vmatpush1.bf16.msra.mxu0 0
        %519 = vmatprep.subr.bf16.mxu0 0
        %520 = vmatpush1.bf16.msra.mxu0 0
        %521 = vmatprep.subr.bf16.mxu0 0
        %522 = vmatpush1.bf16.msra.mxu0 0
        %523 = vmatprep.subr.bf16.mxu0 0
        %524 = vmatpush1.bf16.msra.mxu0 0
        %525 = vmatprep.subr.bf16.mxu0 0
        %526 = vmatpush1.bf16.msra.mxu0 0
        %527 = vmatprep.subr.bf16.mxu0 0
        %528 = vmatpush1.bf16.msra.mxu0 0
        %529 = vmatprep.subr.bf16.mxu0 0
        %530 = vmatpush1.bf16.msra.mxu0 0
        %531 = vmatprep.subr.bf16.mxu0 0
        %532 = vmatpush1.bf16.msra.mxu0 0
        %533 = vmatprep.mubr.bf16.mxu0 0
        %534 = vmatmul.mubr.bf16.gmra.mrb[0].mxu0 %v495
        %v535 = vpop.f32.mrb[0].mxu0
        %v536 = vadd.f32 0.0, %v535
        %v537 = vpop.f32.mrb[0].mxu0
        %v538 = vpop.f32.mrb[0].mxu0
        %v539 = vpop.f32.mrb[0].mxu0
        %540 = vdwg.mxu0
        %v541 = vrcp.pop %v490
        %v542 = vmul.f32 %v536, %v541
        %543 = vst.msk [vmem:[%s136] sm:$0xff] %vm434, %v542
        %s544 = sand.u32 %s71, 1
        %s545 = scalar_lea.sflag [#allocation4], %s544
        %s546 = sand.u32 %s71, 1
        %s547 = smul.addr %s546, 8
        %s548 = scalar_lea.vmem [#allocation3], %s547
        // Predicated region
        $region29: #{tpu_custom_call.1} parent=27 // pred_check
          %p549 = pneg %p81
        $region30: #{tpu_custom_call.1} parent=27 // pred_check_branch
          %551 = sbr.rel (%p549) target = $region32
        $region31: #{tpu_custom_call.1} parent=27 // pred_region
          %s553 = ssub.s32 128, 128
          %554 = vsyncadd %s545, %s553
          %s555 = smul.addr %s16, 128
          %s556 = scalar_lea.hbm %s2, %s555
          %s558 = sshll.u32 %s548, 4
          %s559 = int_to_ptr.vmem [resolvable:$true] %s558
          %561 = dma.vmem_to_hbm [thread:$0]  %s559, 128, %s556, %s545
        $region32: #{tpu_custom_call.1} parent=27 // pred_fallthru
          _
      $region28: #{tpu_custom_call.1} parent=5 // pred_fallthru
        _
      %p562 = scmp.le.s32.totalorder 2, %s11
      // Predicated region
      $region33: #{tpu_custom_call.1} parent=5 // pred_check
        %p563 = pneg %p562
      $region34: #{tpu_custom_call.1} parent=5 // pred_check_branch
        %565 = sbr.rel (%p563) target = $region36
      $region35: #{tpu_custom_call.1} parent=5 // pred_region
        %s566 = ssub.s32 %s11, 2
        // Predicated region
        $region37: #{tpu_custom_call.1} parent=35 // pred_check
          %p567 = pneg %p87
        $region38: #{tpu_custom_call.1} parent=35 // pred_check_branch
          %569 = sbr.rel (%p567) target = $region40
        $region39: #{tpu_custom_call.1} parent=35 // pred_region
          %s570 = sand.u32 %s72, 1
          %s571 = scalar_lea.sflag [#allocation4], %s570
          %s572 = sand.u32 %s72, 1
          %s573 = smul.addr %s572, 8
          %s574 = scalar_lea.vmem [#allocation3], %s573
          %575 = dma.done %s571, 128
        $region40: #{tpu_custom_call.1} parent=35 // pred_fallthru
          _
      $region36: #{tpu_custom_call.1} parent=5 // pred_fallthru
        _
    $region6: #{tpu_custom_call.1} parent=1 // loop_footer
      %s15 = sadd.s32 1, %s11
    $region7: #{tpu_custom_call.1} parent=1 // loop_footer_branch
      %10 = sbr.rel target = $region3
    $region8: #{tpu_custom_call.1} parent=1 // loop_exit
      _
    %576 = vsyncpa [#allocation4], 1
    %s577 = scalar_lea.sflag [#allocation4], 1
    %578 = vsyncpa %s577, 1

</llo_original>
